<compile_context>
chip_gen: v6e
topology: v6e:2x2x1
jax: 0.10.0
libtpu: 0.0.40
codegen_flags: <defaults>
</compile_context>

<pallas_src>
import functools

import jax
import jax.numpy as jnp
from jax import lax
from jax.experimental import pallas as pl
from jax.experimental.pallas import tpu as pltpu


def _contrastive_loss_kernel(q_ref, d_hbm_ref, out_ref,
                             d_stage_ref, dn_ref, copy_sem, *,
                             temperature: float, tq: int, batch: int):
    i = pl.program_id(0)
    eps2 = jnp.float32(1e-12 * 1e-12)          # F.normalize eps, squared
    inv_t = jnp.float32(1.0 / temperature)

    @pl.when(i == 0)
    def _init():
        out_ref[0, 0] = jnp.float32(0.0)
        # One-time DMA of the whole doc matrix HBM -> VMEM staging, then
        # normalize ONCE into the (bf16) scratch reused by every grid step.
        cp = pltpu.make_async_copy(d_hbm_ref, d_stage_ref, copy_sem)
        cp.start()
        cp.wait()
        d = d_stage_ref[...]
        inv_norm = lax.rsqrt(jnp.maximum(jnp.sum(d * d, axis=1, keepdims=True), eps2))
        dn_ref[...] = (d * inv_norm).astype(dn_ref.dtype)

    # Normalize this query tile; fold 1/temperature into it (O(tq*H), once per row).
    q = q_ref[...].astype(jnp.float32)                               # (tq, H)
    q_inv_norm = lax.rsqrt(jnp.maximum(jnp.sum(q * q, axis=1, keepdims=True), eps2))
    qs = q * (q_inv_norm * inv_t)                                    # (tq, H) f32

    # Logits block (tq, B): contract dim 1 of both operands (A @ B^T form, as in
    # the standard flash-attention kernels -> no rhs relayout / per-step vxpose).
    rhs = dn_ref[...]                                                # (B, H) cached normalized
    sim = lax.dot_general(qs.astype(rhs.dtype), rhs,
                          dimension_numbers=(((1,), (1,)), ((), ())),
                          preferred_element_type=jnp.float32)        # (tq, B) f32

    # Row-wise, max-shifted logsumexp over all B docs.
    m = jnp.max(sim, axis=1, keepdims=True)                          # (tq, 1)
    lse = m + jnp.log(jnp.sum(jnp.exp(sim - m), axis=1, keepdims=True))

    # Diagonal logits: global row (i*tq + r) pairs with doc (i*tq + r).
    # Slice the cached normalized docs -- no reload, no renormalization.
    start = i * tq
    if tq % 8 == 0:
        start = pl.multiple_of(start, 8)
    dn_blk = dn_ref[pl.ds(start, tq), :].astype(jnp.float32)         # (tq, H)
    diag = jnp.sum(qs * dn_blk, axis=1, keepdims=True)               # (tq, 1), temp folded in

    # Accumulate this block's contribution to the mean loss (scalar in SMEM).
    out_ref[0, 0] += jnp.sum(lse - diag) * jnp.float32(1.0 / batch)


def _pick_row_tile(b: int) -> int:
    # Cap at 256 (fills the 256-wide MXU M-dim on v6e/v7x; 128+ fine on v5e),
    # and prefer >= 4 grid steps so the q-tile DMA can pipeline.
    for t in (256, 128, 64, 32, 16, 8):
        if t <= b and b % t == 0 and b // t >= 4:
            return t
    for t in (256, 128, 64, 32, 16, 8):
        if t <= b and b % t == 0:
            return t
    return b  # tiny / odd batches: one block equal to the full array


def contrastive_loss(query_embeddings: jax.Array,
                     doc_embeddings: jax.Array,
                     temperature: float = 0.07,
                     use_bf16_matmul: bool = True) -> jax.Array:
    """Pallas implementation of ContrastiveLoss.forward. Returns a scalar."""
    assert query_embeddings.shape == doc_embeddings.shape
    assert query_embeddings.ndim == 2
    b, h = query_embeddings.shape
    tq = _pick_row_tile(b)
    grid = (b // tq,)

    doc_dtype = jnp.bfloat16 if use_bf16_matmul else jnp.float32
    doc_bytes = 2 if use_bf16_matmul else 4

    # Resident footprint: f32 doc staging + cached normalized docs + double-
    # buffered q tile + (tq, B) logits temporaries + headroom.
    vmem_needed = (b * h * 4) + (b * h * doc_bytes) + (2 * tq * h * 4) \
        + (4 * tq * b * 4) + (4 << 20)
    vmem_limit = int(min(max(vmem_needed, 32 << 20), 64 << 20))

    kernel = functools.partial(
        _contrastive_loss_kernel,
        temperature=float(temperature), tq=tq, batch=b)

    out = pl.pallas_call(
        kernel,
        out_shape=jax.ShapeDtypeStruct((1, 1), jnp.float32),
        grid=grid,
        in_specs=[
            pl.BlockSpec((tq, h), lambda i: (i, 0)),   # query row tile (auto-pipelined)
            pl.BlockSpec(memory_space=pl.ANY),         # docs stay in HBM; manual one-time DMA
        ],
        # Scalar result lives in SMEM; same block across the grid => accumulator.
        out_specs=pl.BlockSpec(memory_space=pltpu.MemorySpace.SMEM),
        scratch_shapes=[
            pltpu.VMEM((b, h), jnp.float32),           # one-time doc staging
            pltpu.VMEM((b, h), doc_dtype),             # cached normalized docs (MXU rhs)
            pltpu.SemaphoreType.DMA(()),               # doc-copy completion
        ],
        compiler_params=pltpu.CompilerParams(
            # Row axis carries the scalar accumulator + step-0 init -> "arbitrary".
            dimension_semantics=("arbitrary",),
            vmem_limit_bytes=vmem_limit),
    )(query_embeddings.astype(jnp.float32), doc_embeddings.astype(jnp.float32))
    return out[0, 0]


def _reference_loss(q, d, temperature=0.07):
    # Pure-JAX reference for sanity checking.
    qn = q / jnp.maximum(jnp.linalg.norm(q, axis=1, keepdims=True), 1e-12)
    dn = d / jnp.maximum(jnp.linalg.norm(d, axis=1, keepdims=True), 1e-12)
    sim = (qn @ dn.T) / temperature
    labels = jnp.arange(sim.shape[0])
    logp = jax.nn.log_softmax(sim, axis=1)
    return -jnp.mean(logp[jnp.arange(sim.shape[0]), labels])


if __name__ == "__main__":
    key = jax.random.PRNGKey(0)
    kq, kd = jax.random.split(key)
    B, H = 8, 32  # small shapes: batch of 8 query/doc embedding pairs, hidden=32
    q = jax.random.normal(kq, (B, H), dtype=jnp.float32)
    d = jax.random.normal(kd, (B, H), dtype=jnp.float32)

    ref = _reference_loss(q, d, temperature=0.07)

    # Default (fast) path: bf16 MXU operands, f32 accumulation.
    loss_bf16 = contrastive_loss(q, d, temperature=0.07)
    jax.block_until_ready(loss_bf16)
    assert jnp.allclose(loss_bf16, ref, atol=5e-2, rtol=2e-2), (loss_bf16, ref)

    # f32 path for tight-tolerance verification against the f32 reference.
    loss_f32 = contrastive_loss(q, d, temperature=0.07, use_bf16_matmul=False)
    jax.block_until_ready(loss_f32)
    assert jnp.allclose(loss_f32, ref, atol=1e-4, rtol=1e-4), (loss_f32, ref)

    print("KERNEL_OK")
</pallas_src>

<mosaic_0001>
module attributes {stable_mosaic.version = 11 : i64} {
  func.func @_contrastive_loss_kernel(%arg0: i32, %arg1: memref<8x32xf32, #tpu.memory_space<vmem>>, %arg2: memref<8x32xf32, #tpu.memory_space<any>>, %arg3: memref<1x1xf32, #tpu.memory_space<smem>>, %arg4: memref<8x32xf32, #tpu.memory_space<vmem>>, %arg5: memref<8x32xbf16, #tpu.memory_space<vmem>>, %arg6: memref<!tpu.dma_semaphore, #tpu.memory_space<semaphore_mem>>) attributes {dimension_semantics = [#tpu.dimension_semantics<arbitrary>], iteration_bounds = array<i64: 1>, scalar_prefetch = 0 : i64, scratch_operands = 3 : i64, tpu.core_type = #tpu.core_type<tc>, window_params = [{transform_indices = @transform_0, window_bounds = array<i64: 8, 32>}, {}, {transform_indices = @transform_2, window_bounds = array<i64: 1, 1>}]} {
    %c0_i32 = arith.constant 0 : i32
    %0 = arith.cmpi eq, %arg0, %c0_i32 : i32
    %1 = arith.extui %0 : i1 to i32
    %cst = arith.constant 1.000000e-24 : f32
    %c0_i32_0 = arith.constant 0 : i32
    %2 = arith.cmpi ne, %1, %c0_i32_0 : i32
    scf.if %2 {
      %cst_18 = arith.constant 0.000000e+00 : f32
      %c0_19 = arith.constant 0 : index
      %c0_20 = arith.constant 0 : index
      %43 = memref.load %arg3[%c0_19, %c0_20] : memref<1x1xf32, #tpu.memory_space<smem>>
      memref.store %cst_18, %arg3[%c0_19, %c0_20] : memref<1x1xf32, #tpu.memory_space<smem>>
      tpu.enqueue_dma source(%arg2 : memref<8x32xf32, #tpu.memory_space<any>>) target(%arg4 : memref<8x32xf32, #tpu.memory_space<vmem>>) target_semaphore(%arg6 : memref<!tpu.dma_semaphore, #tpu.memory_space<semaphore_mem>>)
      tpu.wait_dma2 semaphore(%arg6 : memref<!tpu.dma_semaphore, #tpu.memory_space<semaphore_mem>>) src(%arg2 : memref<8x32xf32, #tpu.memory_space<any>>) dst(%arg4 : memref<8x32xf32, #tpu.memory_space<vmem>>)
      %c0_21 = arith.constant 0 : index
      %c0_22 = arith.constant 0 : index
      %44 = vector.load %arg4[%c0_21, %c0_22] : memref<8x32xf32, #tpu.memory_space<vmem>>, vector<8x32xf32>
      %45 = arith.mulf %44, %44 : vector<8x32xf32>
      %cst_23 = arith.constant dense<0.000000e+00> : vector<8xf32>
      %46 = vector.multi_reduction <add>, %45, %cst_23 [1] : vector<8x32xf32> to vector<8xf32>
      %47 = vector.shape_cast %46 : vector<8xf32> to vector<8x1xf32>
      %48 = vector.broadcast %cst : f32 to vector<8x1xf32>
      %49 = arith.maximumf %47, %48 : vector<8x1xf32>
      %50 = math.rsqrt %49 : vector<8x1xf32>
      %51 = vector.broadcast %50 : vector<8x1xf32> to vector<8x32xf32>
      %52 = arith.mulf %44, %51 : vector<8x32xf32>
      %53 = arith.truncf %52 : vector<8x32xf32> to vector<8x32xbf16>
      %c0_24 = arith.constant 0 : index
      %c0_25 = arith.constant 0 : index
      %54 = vector.load %arg5[%c0_24, %c0_25] : memref<8x32xbf16, #tpu.memory_space<vmem>>, vector<8x32xbf16>
      tpu.vector_store %arg5[%c0_24, %c0_25], %53 {strides = array<i32>} : memref<8x32xbf16, #tpu.memory_space<vmem>>, vector<8x32xbf16>,
    } else {
    }
    %c0 = arith.constant 0 : index
    %c0_1 = arith.constant 0 : index
    %3 = vector.load %arg1[%c0, %c0_1] : memref<8x32xf32, #tpu.memory_space<vmem>>, vector<8x32xf32>
    %4 = arith.mulf %3, %3 : vector<8x32xf32>
    %cst_2 = arith.constant dense<0.000000e+00> : vector<8xf32>
    %5 = vector.multi_reduction <add>, %4, %cst_2 [1] : vector<8x32xf32> to vector<8xf32>
    %6 = vector.shape_cast %5 : vector<8xf32> to vector<8x1xf32>
    %cst_3 = arith.constant 1.000000e-24 : f32
    %7 = vector.broadcast %cst_3 : f32 to vector<8x1xf32>
    %8 = arith.maximumf %6, %7 : vector<8x1xf32>
    %9 = math.rsqrt %8 : vector<8x1xf32>
    %cst_4 = arith.constant 14.2857141 : f32
    %10 = vector.broadcast %cst_4 : f32 to vector<8x1xf32>
    %11 = arith.mulf %9, %10 : vector<8x1xf32>
    %12 = vector.broadcast %11 : vector<8x1xf32> to vector<8x32xf32>
    %13 = arith.mulf %3, %12 : vector<8x32xf32>
    %c0_5 = arith.constant 0 : index
    %c0_6 = arith.constant 0 : index
    %14 = vector.load %arg5[%c0_5, %c0_6] : memref<8x32xbf16, #tpu.memory_space<vmem>>, vector<8x32xbf16>
    %15 = arith.truncf %13 : vector<8x32xf32> to vector<8x32xbf16>
    %cst_7 = arith.constant dense<0.000000e+00> : vector<8x8xf32>
    %16 = tpu.matmul %15, %14, %cst_7 {dimension_numbers = #tpu.dot_dimension_numbers<[1], [1], [0], [0], [0, 0, 1, 0], [], []>} : vector<8x32xbf16>, vector<8x32xbf16>, vector<8x8xf32> -> vector<8x8xf32>
    %cst_8 = arith.constant dense<0xFF800000> : vector<8xf32>
    %17 = vector.multi_reduction <maximumf>, %16, %cst_8 [1] : vector<8x8xf32> to vector<8xf32>
    %18 = vector.shape_cast %17 : vector<8xf32> to vector<8x1xf32>
    %19 = vector.broadcast %18 : vector<8x1xf32> to vector<8x8xf32>
    %20 = arith.subf %16, %19 : vector<8x8xf32>
    %21 = math.exp %20 : vector<8x8xf32>
    %cst_9 = arith.constant dense<0.000000e+00> : vector<8xf32>
    %22 = vector.multi_reduction <add>, %21, %cst_9 [1] : vector<8x8xf32> to vector<8xf32>
    %23 = vector.shape_cast %22 : vector<8xf32> to vector<8x1xf32>
    %24 = math.log %23 : vector<8x1xf32>
    %25 = arith.addf %18, %24 : vector<8x1xf32>
    %c8_i32 = arith.constant 8 : i32
    %26 = arith.muli %arg0, %c8_i32 : i32
    %27 = tpu.assume_multiple %26, 8 : i32
    %28 = arith.index_cast %27 : i32 to index
    %c0_10 = arith.constant 0 : index
    %29 = vector.load %arg5[%28, %c0_10] : memref<8x32xbf16, #tpu.memory_space<vmem>>, vector<8x32xbf16>
    %30 = arith.extf %29 : vector<8x32xbf16> to vector<8x32xf32>
    %31 = arith.mulf %13, %30 : vector<8x32xf32>
    %cst_11 = arith.constant dense<0.000000e+00> : vector<8xf32>
    %32 = vector.multi_reduction <add>, %31, %cst_11 [1] : vector<8x32xf32> to vector<8xf32>
    %33 = vector.shape_cast %32 : vector<8xf32> to vector<8x1xf32>
    %c0_12 = arith.constant 0 : index
    %c0_13 = arith.constant 0 : index
    %34 = memref.load %arg3[%c0_12, %c0_13] : memref<1x1xf32, #tpu.memory_space<smem>>
    %35 = arith.subf %25, %33 : vector<8x1xf32>
    %36 = vector.shape_cast %35 : vector<8x1xf32> to vector<1x8x1xf32>
    %cst_14 = arith.constant dense<0.000000e+00> : vector<1xf32>
    %37 = vector.multi_reduction <add>, %36, %cst_14 [1, 2] : vector<1x8x1xf32> to vector<1xf32>
    %38 = vector.shape_cast %37 : vector<1xf32> to vector<1x1x1xf32>
    %39 = vector.extract %38[0, 0, 0] : f32 from vector<1x1x1xf32>
    %cst_15 = arith.constant 1.250000e-01 : f32
    %40 = arith.mulf %39, %cst_15 : f32
    %41 = arith.addf %34, %40 : f32
    %c0_16 = arith.constant 0 : index
    %c0_17 = arith.constant 0 : index
    %42 = memref.load %arg3[%c0_16, %c0_17] : memref<1x1xf32, #tpu.memory_space<smem>>
    memref.store %41, %arg3[%c0_16, %c0_17] : memref<1x1xf32, #tpu.memory_space<smem>>
    return
  }
  func.func @transform_0(%arg0: i32) -> (i32, i32) {
    %c0_i32 = arith.constant 0 : i32
    %c0_i32_0 = arith.constant 0 : i32
    return %arg0, %c0_i32 : i32, i32
  }
  func.func @transform_2(%arg0: i32) -> (i32, i32) {
    %c0_i32 = arith.constant 0 : i32
    %c0_i32_0 = arith.constant 0 : i32
    %c0_i32_1 = arith.constant 0 : i32
    return %c0_i32, %c0_i32_0 : i32, i32
  }
}

</mosaic_0001>

<llo_original>
// kernel: tpu_custom_call.1
$region0: #{tpu_custom_call.1}
  #allocation0 [shape = 'u32[]', space=smem, size = 0x4, offset = 0x4, fixed_abs, tag = 'smem constant byte address 0x4 - core index']
  #allocation1 [shape = 'u32[144,128]{1,0:T(1,128)}', space=vmem, size = 0x12000, scoped, tag = 'internal scratch']
  #allocation2 [shape = 'f32[8,32]{1,0:T(8,128)}', space=vmem, size = 0x1000, scoped, tag = 'scratch operand']
  #allocation3 [shape = 'bf16[8,32]{1,0:T(8,128)(2,1)}', space=vmem, size = 0x800, scoped, tag = 'scratch operand']
  #allocation4 [shape = 's32[1]{0}', space=sflag, size = 0x4, scoped, tag = 'scratch operand']
  #allocation9 [shape = 's32[]', space=sflag, size = 0x4, offset = 0, fixed_abs, tag = 'sflag constant byte address 0x0 - dummy sync flag']
  #allocation10 [shape = 's32[]', space=sflag, size = 0x4, offset = 0, fixed_abs, tag = 'sflag constant byte address 0x0 - dummy sync flag']
  #allocation11 [shape = 'u32[]', space=smem, size = 0x4, offset = 0x44, fixed_abs, tag = 'smem constant byte address 0x44 - assertion arg 0']
  #allocation12 [shape = 'u32[]', space=smem, size = 0x4, offset = 0x48, fixed_abs, tag = 'smem constant byte address 0x48 - assertion arg 1']
  %s0 = inlined_call_operand.hbm [shape: f32[8,32], index: 0, kind: input, shape index: {}]
  %s1 = inlined_call_operand.hbm [shape: f32[8,32], index: 1, kind: input, shape index: {}]
  %s2 = inlined_call_operand.hbm [shape: f32[1,1], index: 2, kind: output, shape index: {}]
  %s3 = sld [smem:[#allocation0]]
  $region26: #{tpu_custom_call.1} parent=0
    _
  %s5 = ssub.s32 1, %s3
  %s6 = scalar_select 0, %s5, %s3
  $region1: #{tpu_custom_call.1} parent=0
    #allocation5 [shape = 'u8[4096]{0}', space=vmem, size = 0x1000, scoped, tag = 'input window, operand 0, single buffered']
    #allocation6 [shape = 's32[1]{0}', space=sflag, size = 0x4, scoped, tag = 'scoped memory for tpu_custom_call.1']
    #allocation7 [shape = 's32[1]{0}', space=sflag, size = 0x4, scoped, tag = 'scoped memory for tpu_custom_call.1']
    #allocation8 [shape = 'u8[512]{0}', space=smem, size = 0x200, scoped, tag = 'output window, operand 0, single buffered']
    %7 = vsyncpa [#allocation6], 0
    %8 = vsyncpa [#allocation7], 0
    // Predicated region
    $region2: #{tpu_custom_call.1} parent=1 // pred_check
      _
    $region3: #{tpu_custom_call.1} parent=1 // pred_check_branch
      %10 = sbr.rel (0) target = $region5
    $region4: #{tpu_custom_call.1} parent=1 // pred_region
      %s12 = ssub.s32 128, 128
      %13 = vsyncadd [#allocation6], %s12
      %s15 = sshll.u32 [#allocation5], 4
      %s16 = int_to_ptr.vmem [resolvable:$true] %s15
      %18 = dma.hbm_to_vmem [thread:$0]  %s0, 128, %s16, [#allocation6]
    $region5: #{tpu_custom_call.1} parent=1 // pred_fallthru
      _
    // Predicated region
    $region6: #{tpu_custom_call.1} parent=1 // pred_check
      _
    $region7: #{tpu_custom_call.1} parent=1 // pred_check_branch
      %20 = sbr.rel (0) target = $region9
    $region8: #{tpu_custom_call.1} parent=1 // pred_region
      %21 = dma.done [#allocation6], 128
    $region9: #{tpu_custom_call.1} parent=1 // pred_fallthru
      _
    %p23 = scmp.eq.s32.totalorder 0, 0
    // Predicated region
    $region10: #{tpu_custom_call.1} parent=1 // pred_check
      %p24 = pneg %p23
    $region11: #{tpu_custom_call.1} parent=1 // pred_check_branch
      %26 = sbr.rel (%p24) target = $region13
    $region12: #{tpu_custom_call.1} parent=1 // pred_region
      %s27 = scalar_lea.smem [#allocation8], 0
      %28 = sst [smem:[%s27]] 0.0
      // Predicated region
      $region14: #{tpu_custom_call.1} parent=12 // pred_check
        _
      $region15: #{tpu_custom_call.1} parent=12 // pred_check_branch
        %30 = sbr.rel target = $region17
      $region16: #{tpu_custom_call.1} parent=12 // pred_region
        %31 = sst [smem:[#allocation11]] [#allocation10]
        %32 = sst [smem:[#allocation12]] [#allocation9]
      $region17: #{tpu_custom_call.1} parent=12 // pred_fallthru
        _
      %34 = shalt.err (0)
      %s36 = sshll.u32 [#allocation2], 4
      %s37 = int_to_ptr.vmem [resolvable:$true] %s36
      %39 = dma.hbm_to_vmem [thread:$0]  %s1, 128, %s37, [#allocation4]
      %s40 = smul.u32 8, 1
      %s41 = sshll.u32 %s40, 4
      %42 = dma.done [#allocation4], %s41
      %v43 = vld [vmem:[#allocation2] sm:$0xff]
      %v44 = vmul.f32 %v43, %v43
      %vm45 = vcmask 261120
      %v46 = vsel %vm45, %v44, 0.0
      %47 = vadd.xlane.f32.xlu0 %v46
      %v48 = vpop.xlane.xlu0 %47
      %v49 = vmax.f32 %v48, 1e-24
      %v50 = vrsqrt.pop %v49
      %v51 = vmul.f32 %v43, %v50
      %v52 = vpack.c.bf16 %v51, %v51
      %vm53 = vcmask 257024
      %54 = vst.msk [vmem:[#allocation3] sm:$0xf] %vm53, %v52
    $region13: #{tpu_custom_call.1} parent=1 // pred_fallthru
      _
    %v55 = vld [vmem:[#allocation5] sm:$0xff]
    %v56 = vmul.f32 %v55, %v55
    %vm57 = vcmask 261120
    %v58 = vsel %vm57, %v56, 0.0
    %59 = vadd.xlane.f32.xlu0 %v58
    %v60 = vpop.xlane.xlu0 %59
    %v61 = vmax.f32 %v60, 1e-24
    %v62 = vrsqrt.pop %v61
    %v63 = vmul.f32 %v62, 14.285714
    %v64 = vmul.f32 %v55, %v63
    %v65 = vld [vmem:[#allocation3] sm:$0xf]
    %v66 = vpack.c.bf16 %v64, %v64
    %v68 = vsel %vm57, %v66, 0
    %v71 = vsel %vm57, %v65, 0
    %73 = vmatprep.subr.bf16.mxu0 0
    %74 = vmatpush1.bf16.xpose.msra.mxu0 0
    %75 = vmatprep.subr.bf16.mxu0 0
    %76 = vmatpush1.bf16.xpose.msra.mxu0 0
    %77 = vmatprep.subr.bf16.mxu0 0
    %78 = vmatpush1.bf16.xpose.msra.mxu0 0
    %79 = vmatprep.subr.bf16.mxu0 0
    %80 = vmatpush1.bf16.xpose.msra.mxu0 0
    %81 = vmatprep.subr.bf16.mxu0 0
    %82 = vmatpush1.bf16.xpose.msra.mxu0 0
    %83 = vmatprep.subr.bf16.mxu0 0
    %84 = vmatpush1.bf16.xpose.msra.mxu0 0
    %85 = vmatprep.subr.bf16.mxu0 0
    %86 = vmatpush1.bf16.xpose.msra.mxu0 0
    %87 = vmatprep.subr.bf16.mxu0 0
    %88 = vmatpush1.bf16.xpose.msra.mxu0 %v71
    %89 = vmatprep.subr.bf16.mxu0 0
    %90 = vmatpush2.bf16.xpose.msra.mxu0 0
    %91 = vmatprep.subr.bf16.mxu0 0
    %92 = vmatpush2.bf16.xpose.msra.mxu0 0
    %93 = vmatprep.subr.bf16.mxu0 0
    %94 = vmatpush2.bf16.xpose.msra.mxu0 0
    %95 = vmatprep.subr.bf16.mxu0 0
    %96 = vmatpush2.bf16.xpose.msra.mxu0 0
    %97 = vmatprep.subr.bf16.mxu0 0
    %98 = vmatpush2.bf16.xpose.msra.mxu0 0
    %99 = vmatprep.subr.bf16.mxu0 0
    %100 = vmatpush2.bf16.xpose.msra.mxu0 0
    %101 = vmatprep.subr.bf16.mxu0 0
    %102 = vmatpush2.bf16.xpose.msra.mxu0 0
    %103 = vmatprep.subr.bf16.mxu0 0
    %104 = vmatpush2.bf16.xpose.msra.mxu0 0
    %105 = vmatprep.mubr.bf16.mxu0 0
    %106 = vmatmul.mubr.bf16.gmra.mxu0 %v68
    %v107 = vpop.f32.mrf.mxu0
    %v108 = vadd.f32 0.0, %v107
    %v109 = vpop.f32.mrf.mxu0
    %v110 = vpop.f32.mrf.mxu0
    %v111 = vpop.f32.mrf.mxu0
    %112 = vdwg.mxu0
    %vm113 = vcmask 64512
    %v114 = vsel %vm113, %v108, -inf
    %115 = vmax.xlane.f32.xlu0 %v114
    %v116 = vpop.xlane.xlu0 %115
    %v117 = vsub.f32 %v108, %v116
    %v118 = vmul.f32 %v117, 1.442695
    %v119 = vpow.pop %v118
    %v120 = vsel %vm113, %v119, 0.0
    %121 = vadd.xlane.f32.xlu0 %v120
    %v122 = vpop.xlane.xlu0 %121
    %v123 = vlog2.pop %v122
    %v124 = vmul.f32 %v123, 0.6931472
    %v125 = vadd.f32 %v116, %v124
    %s126 = smul.u32 0, 8
    %s127 = sshra.s32 %s126, 3
    %s128 = sand.u32 %s126, 7
    %s129 = smul.addr %s127, 4
    %s130 = scalar_lea.vmem [#allocation3], %s129
    %v131 = vld [vmem:[%s130] sm:$0xf]
    %v132 = vunpack.c.l.bf16 %v131
    %v133 = vmul.f32 %v64, %v132
    %v134 = vsel %vm57, %v133, 0.0
    %135 = vadd.xlane.f32.xlu0 %v134
    %v136 = vpop.xlane.xlu0 %135
    %s137 = sld [smem:[#allocation8]]
    %v138 = vsub.f32 %v125, %v136
    %vm139 = vcmask 7168
    %v140 = vsel %vm139, %v138, 0.0
    %141 = vadd.xlane.f32.xlu0 %v140
    %v142 = vpop.xlane.xlu0 %141
    %v143 = vrot.slane %v142, 4
    %v144 = vadd.f32 %v142, %v143
    %v145 = vrot.slane %v144, 2
    %v146 = vadd.f32 %v144, %v145
    %v147 = vrot.slane %v146, 1
    %v148 = vadd.f32 %v146, %v147
    %s149 = vtos %v148
    %s150 = smul.f32 %s149, 0.125
    %s151 = sadd.f32 %s137, %s150
    %s152 = scalar_lea.smem [#allocation8], 0
    %153 = sst [smem:[%s152]] %s151
    // Predicated region
    $region18: #{tpu_custom_call.1} parent=1 // pred_check
      _
    $region19: #{tpu_custom_call.1} parent=1 // pred_check_branch
      %155 = sbr.rel (0) target = $region21
    $region20: #{tpu_custom_call.1} parent=1 // pred_region
      %s157 = ssub.s32 16, 16
      %158 = vsyncadd [#allocation7], %s157
      %161 = dma.smem_to_hbm [#allocation8], 16, %s2, [#allocation7]
    $region21: #{tpu_custom_call.1} parent=1 // pred_fallthru
      _
    // Predicated region
    $region22: #{tpu_custom_call.1} parent=1 // pred_check
      _
    $region23: #{tpu_custom_call.1} parent=1 // pred_check_branch
      %163 = sbr.rel (0) target = $region25
    $region24: #{tpu_custom_call.1} parent=1 // pred_region
      %164 = dma.done [#allocation7], 16
    $region25: #{tpu_custom_call.1} parent=1 // pred_fallthru
      _
    %165 = sfence
    %166 = vsyncpa [#allocation6], 1
    %167 = vsyncpa [#allocation7], 1
  %168 = vsyncmov [#allocation4]
  %s169 = vpop.sfrf %168
  %p170 = scmp.eq.s32.totalorder %s169, 0
  %p171 = pneg %p170
  %173 = shalt.err (%p171)

</llo_original>
